<compile_context>
chip_gen: v7x
topology: tpu7x:2x2x1
jax: 0.10.0
libtpu: 0.0.40
codegen_flags: <defaults>
</compile_context>

<pallas_src>
import jax
import jax.numpy as jnp
from jax.experimental import pallas as pl
from jax.experimental.pallas import tpu as pltpu


# ---------------------------------------------------------------------------
# Kernels
# ---------------------------------------------------------------------------

def _fused_avg_kernel(x_ref, m_ref, inv_ref, w_ref, b_ref, o_ref):
    # x_ref  : (TB, TS, E) bf16  token-embedding tile
    # m_ref  : (TB, TS, 1) f32   attention-mask tile
    # inv_ref: (TB, 1)     f32   1 / clamp(mask.sum(1), 1)  (exact, precomputed)
    # w_ref  : (E, H)      bf16  encoder weight (VMEM-resident across grid)
    # b_ref  : (1, H)      f32   encoder bias   (VMEM-resident across grid)
    # o_ref  : (TB, H)     f32   masked-sum accumulator / final mean
    s_idx = pl.program_id(1)
    tb, ts, e = x_ref.shape
    h = w_ref.shape[1]

    @pl.when(s_idx == 0)
    def _init():
        o_ref[...] = jnp.zeros_like(o_ref)

    # backbone dense + tanh: (TB*TS, E) @ (E, H) on the MXU (bf16 in, f32 acc)
    x2 = x_ref[...].reshape(tb * ts, e)
    hid = jnp.tanh(
        jnp.dot(x2, w_ref[...], preferred_element_type=jnp.float32) + b_ref[...]
    ).reshape(tb, ts, h)

    # masked-sum accumulation (SentenceEncoderAvg numerator)
    o_ref[...] += jnp.sum(hid * m_ref[...], axis=1)

    @pl.when(s_idx == pl.num_programs(1) - 1)
    def _finalize():
        o_ref[...] = o_ref[...] * inv_ref[...]


def _fused_cls_kernel(x0_ref, w_enc_ref, b_enc_ref, w_pool_ref, b_pool_ref, o_ref):
    # pooler_output = tanh(tanh(x0 @ W_enc + b_enc) @ W_pool + b_pool)
    h = jnp.tanh(
        jnp.dot(x0_ref[...], w_enc_ref[...], preferred_element_type=jnp.float32)
        + b_enc_ref[...])
    o_ref[...] = jnp.tanh(
        jnp.dot(h.astype(jnp.bfloat16), w_pool_ref[...],
                preferred_element_type=jnp.float32) + b_pool_ref[...])


# ---------------------------------------------------------------------------
# Tile selection (VMEM-budget aware, megacore-friendly)
# ---------------------------------------------------------------------------

def _tile_candidates(dim):
    """Divisors of `dim` legal in a second-to-last block-dim position
    (divisible by 8 or equal to the full dim)."""
    return [d for d in range(dim, 0, -1)
            if dim % d == 0 and (d % 8 == 0 or d == dim)]


def _select_avg_tiles(B, S, E, H, budget_bytes=20 * 1024 * 1024):
    """Joint (TB, TS): biggest tiles under a conservative VMEM budget
    (fits v7x's 64 MiB with headroom), preferring >=2 batch blocks so the
    parallel axis can shard across two TensorCores."""
    tb_all = _tile_candidates(B)
    ts_all = _tile_candidates(S)

    def fits(tb, ts):
        need = (2 * tb * ts * E * 2        # bf16 x tile, double-buffered
                + 2 * tb * ts * 4          # f32 mask tile, double-buffered
                + 2 * tb * 4               # inv tile, double-buffered
                + E * H * 2 + H * 4        # resident weight + bias
                + tb * H * 4               # resident output / accumulator block
                + tb * ts * H * 4          # in-kernel hid intermediate
                + tb * ts * E * 2)         # in-kernel reshape copy headroom
        return need <= budget_bytes

    def best(cands):
        top = None
        for tb in cands:
            for ts in ts_all:
                if not fits(tb, ts):
                    continue
                key = (tb * ts, ts)        # biggest tile, then longest seq chunk
                if top is None or key > top[0]:
                    top = (key, tb, ts)
        return top

    full = best(tb_all)
    if full is None:                       # nothing fits; smallest legal tiles
        return tb_all[-1], ts_all[-1]
    split = best([d for d in tb_all if d <= B // 2])
    # Keep >=2 batch blocks (v7x dual-TC sharding) unless it drops the MXU
    # tile below 256 rows while the single-block choice keeps it.
    if split is not None and (split[0][0] >= 256 or split[0][0] >= full[0][0]):
        return split[1], split[2]
    return full[1], full[2]


def _select_cls_tile(B, max_rows=512):
    cands = _tile_candidates(B)
    pref = [d for d in cands if d <= max(B // 2, 1) and d <= max_rows]
    pick = pref or [d for d in cands if d <= max_rows] or [cands[-1]]
    return pick[0]


# ---------------------------------------------------------------------------
# Wrappers (BlockSpecs / grid)
# ---------------------------------------------------------------------------

def fused_avg_encode(emb, attention_mask, w_enc, b_enc,
                     *, batch_tile=None, seq_tile=None):
    """Masked-average pooled tanh(emb @ w_enc + b_enc); the (B, S, H)
    last_hidden_state is never materialized in HBM."""
    B, S, E = emb.shape
    H = w_enc.shape[1]
    tb_auto, ts_auto = _select_avg_tiles(B, S, E, H)
    TB = batch_tile or tb_auto
    TS = seq_tile or ts_auto
    assert B % TB == 0 and S % TS == 0

    mask3 = attention_mask.astype(jnp.float32)[:, :, None]        # (B, S, 1)
    count = jnp.maximum(mask3.sum(axis=1), 1.0)                    # (B, 1), >= 1
    inv_count = (1.0 / count).astype(jnp.float32)                  # exact f32 div

    flops = 2 * B * S * E * H + 3 * B * S * H
    bytes_accessed = (B * S * E * 2 + mask3.size * 4 + inv_count.size * 4
                      + E * H * 2 + b_enc.size * 4 + B * H * 4)

    return pl.pallas_call(
        _fused_avg_kernel,
        out_shape=jax.ShapeDtypeStruct((B, H), jnp.float32),
        grid_spec=pltpu.PrefetchScalarGridSpec(
            num_scalar_prefetch=0,
            grid=(B // TB, S // TS),
            in_specs=[
                pl.BlockSpec((TB, TS, E), lambda b, s: (b, s, 0)),
                pl.BlockSpec((TB, TS, 1), lambda b, s: (b, s, 0)),
                pl.BlockSpec((TB, 1), lambda b, s: (b, 0)),
                pl.BlockSpec((E, H), lambda b, s: (0, 0)),   # resident weight
                pl.BlockSpec((1, H), lambda b, s: (0, 0)),   # resident bias
            ],
            out_specs=pl.BlockSpec((TB, H), lambda b, s: (b, 0)),
        ),
        compiler_params=pltpu.CompilerParams(
            dimension_semantics=("parallel", "arbitrary"),
            vmem_limit_bytes=40 * 1024 * 1024,
        ),
        cost_estimate=pl.CostEstimate(
            flops=flops, transcendentals=B * S * H, bytes_accessed=bytes_accessed),
    )(emb.astype(jnp.bfloat16), mask3, inv_count,
      w_enc.astype(jnp.bfloat16), b_enc)


def fused_cls_encode(emb_cls, w_enc, b_enc, w_pool, b_pool, *, batch_tile=None):
    """BERT-style pooler_output from the CLS-token embeddings only
    (no (B, S, H) tensor is ever DMA'd)."""
    B, E = emb_cls.shape
    H = w_enc.shape[1]
    TB = batch_tile or _select_cls_tile(B)
    assert B % TB == 0

    return pl.pallas_call(
        _fused_cls_kernel,
        out_shape=jax.ShapeDtypeStruct((B, H), jnp.float32),
        grid_spec=pltpu.PrefetchScalarGridSpec(
            num_scalar_prefetch=0,
            grid=(B // TB,),
            in_specs=[
                pl.BlockSpec((TB, E), lambda b: (b, 0)),
                pl.BlockSpec((E, H), lambda b: (0, 0)),
                pl.BlockSpec((1, H), lambda b: (0, 0)),
                pl.BlockSpec((H, H), lambda b: (0, 0)),
                pl.BlockSpec((1, H), lambda b: (0, 0)),
            ],
            out_specs=pl.BlockSpec((TB, H), lambda b: (b, 0)),
        ),
        compiler_params=pltpu.CompilerParams(
            dimension_semantics=("parallel",),
            vmem_limit_bytes=32 * 1024 * 1024,
        ),
    )(emb_cls.astype(jnp.bfloat16), w_enc.astype(jnp.bfloat16), b_enc,
      w_pool.astype(jnp.bfloat16), b_pool)


# ---------------------------------------------------------------------------
# Synthetic deterministic "model" (stands in for the frozen HF backbone)
# ---------------------------------------------------------------------------

class SentenceEncoderPallas:
    """Frozen synthetic encoder with 'avg' / 'cls' sentence representations."""

    def __init__(self, vocab_size=64, embed_dim=32, hidden_dim=128,
                 representation="avg", seed=0, batch_tile=None, seq_tile=None):
        self.representation = representation
        self.hidden_dim = hidden_dim
        self.batch_tile = batch_tile
        self.seq_tile = seq_tile
        k1, k2, k3, k4, k5 = jax.random.split(jax.random.PRNGKey(seed), 5)
        # Frozen weights stored in bf16 once (no per-call casts; the avg-path
        # embedding gather streams half the HBM bytes).
        self.embed_table = (jax.random.normal(k1, (vocab_size, embed_dim),
                                              jnp.float32) * 0.02).astype(jnp.bfloat16)
        self.w_enc = (jax.random.normal(k2, (embed_dim, hidden_dim),
                                        jnp.float32) * 0.05).astype(jnp.bfloat16)
        self.b_enc = jax.random.normal(k3, (1, hidden_dim), jnp.float32) * 0.01
        self.w_pool = (jax.random.normal(k4, (hidden_dim, hidden_dim),
                                         jnp.float32) * 0.05).astype(jnp.bfloat16)
        self.b_pool = jax.random.normal(k5, (1, hidden_dim), jnp.float32) * 0.01

    def forward(self, net_inputs):
        ids = net_inputs["input_ids"]
        mask = net_inputs["attention_mask"]

        if self.representation == "cls":
            # SentenceEncoderCls: only the CLS row feeds pooler_output, so only
            # position-0 embeddings are gathered and encoded.
            emb0 = jnp.take(self.embed_table, ids[:, 0], axis=0)     # (B, E) bf16
            return fused_cls_encode(emb0, self.w_enc, self.b_enc,
                                    self.w_pool, self.b_pool,
                                    batch_tile=self.batch_tile)

        # SentenceEncoderAvg (the 'sbert' mean-pooling path would reuse this).
        B, S = ids.shape
        emb = jnp.take(self.embed_table, ids.reshape(-1), axis=0).reshape(B, S, -1)
        # TODO(synk): the embedding gather could be folded into the kernel via
        # scalar-prefetch row gather; and since this synthetic backbone is
        # token-independent one could precompute tanh(table @ W + b) — kept as
        # is so the kernel structure matches a real contextual backbone.
        return fused_avg_encode(emb, mask, self.w_enc, self.b_enc,
                                batch_tile=self.batch_tile, seq_tile=self.seq_tile)

    def get_embed_dim(self):
        return self.hidden_dim


# ---------------------------------------------------------------------------
# Driver
# ---------------------------------------------------------------------------

if __name__ == "__main__":
    B, S, E, H, V = 8, 16, 32, 128, 64
    k_ids, _ = jax.random.split(jax.random.PRNGKey(0))

    input_ids = jax.random.randint(k_ids, (B, S), 0, V, dtype=jnp.int32)
    lengths = jnp.array([S, S - 3, S - 5, S, 7, 5, S - 1, 9], dtype=jnp.int32)
    attention_mask = (jnp.arange(S)[None, :] < lengths[:, None]).astype(jnp.int32)
    net_inputs = {"input_ids": input_ids, "attention_mask": attention_mask}

    enc_avg = SentenceEncoderPallas(V, E, H, representation="avg")
    # seq_tile=8 -> two reduction steps over the seq grid axis (exercises the
    # VMEM-resident accumulator init / accumulate / finalize path).
    enc_avg_tiled = SentenceEncoderPallas(V, E, H, representation="avg", seq_tile=8)
    enc_cls = SentenceEncoderPallas(V, E, H, representation="cls")

    out_avg = jax.block_until_ready(enc_avg.forward(net_inputs))
    out_avg_t = jax.block_until_ready(enc_avg_tiled.forward(net_inputs))
    out_cls = jax.block_until_ready(enc_cls.forward(net_inputs))

    # pure-JAX f32 reference built from the same frozen (bf16) weights
    emb = jnp.take(enc_avg.embed_table, input_ids.reshape(-1), axis=0
                   ).reshape(B, S, E).astype(jnp.float32)
    hid = jnp.tanh(emb @ enc_avg.w_enc.astype(jnp.float32) + enc_avg.b_enc)
    m = attention_mask.astype(jnp.float32)
    ref_avg = (hid * m[:, :, None]).sum(axis=1) / m.sum(axis=1, keepdims=True)

    emb0 = jnp.take(enc_cls.embed_table, input_ids[:, 0], axis=0).astype(jnp.float32)
    hid0 = jnp.tanh(emb0 @ enc_cls.w_enc.astype(jnp.float32) + enc_cls.b_enc)
    ref_cls = jnp.tanh(hid0 @ enc_cls.w_pool.astype(jnp.float32) + enc_cls.b_pool)

    assert out_avg.shape == (B, H) and out_avg_t.shape == (B, H) and out_cls.shape == (B, H)
    assert jnp.allclose(out_avg, ref_avg, atol=5e-3, rtol=5e-2), \
        float(jnp.max(jnp.abs(out_avg - ref_avg)))
    assert jnp.allclose(out_avg_t, ref_avg, atol=5e-3, rtol=5e-2), \
        float(jnp.max(jnp.abs(out_avg_t - ref_avg)))
    assert jnp.allclose(out_cls, ref_cls, atol=5e-3, rtol=5e-2), \
        float(jnp.max(jnp.abs(out_cls - ref_cls)))

    print("KERNEL_OK")
</pallas_src>

<mosaic_0001>
module attributes {stable_mosaic.version = 11 : i64} {
  func.func @_fused_avg_kernel(%arg0: i32, %arg1: i32, %arg2: memref<8x16x32xbf16, #tpu.memory_space<vmem>>, %arg3: memref<8x16x1xf32, #tpu.memory_space<vmem>>, %arg4: memref<8x1xf32, #tpu.memory_space<vmem>>, %arg5: memref<32x128xbf16, #tpu.memory_space<vmem>>, %arg6: memref<1x128xf32, #tpu.memory_space<vmem>>, %arg7: memref<8x128xf32, #tpu.memory_space<vmem>>) attributes {dimension_semantics = [#tpu.dimension_semantics<parallel>, #tpu.dimension_semantics<arbitrary>], iteration_bounds = array<i64: 1, 1>, scalar_prefetch = 0 : i64, scratch_operands = 0 : i64, tpu.core_type = #tpu.core_type<tc>, window_params = [{transform_indices = @transform_0, window_bounds = array<i64: 8, 16, 32>}, {transform_indices = @transform_1, window_bounds = array<i64: 8, 16, 1>}, {transform_indices = @transform_2, window_bounds = array<i64: 8, 1>}, {pipeline_mode = #tpu.pipeline_mode<synchronous>, transform_indices = @transform_3, window_bounds = array<i64: 32, 128>}, {pipeline_mode = #tpu.pipeline_mode<synchronous>, transform_indices = @transform_4, window_bounds = array<i64: 1, 128>}, {transform_indices = @transform_5, window_bounds = array<i64: 8, 128>}]} {
    %c0_i32 = arith.constant 0 : i32
    %0 = arith.cmpi eq, %arg1, %c0_i32 : i32
    %1 = arith.extui %0 : i1 to i32
    %c0_i32_0 = arith.constant 0 : i32
    %2 = arith.cmpi ne, %1, %c0_i32_0 : i32
    scf.if %2 {
      %cst_17 = arith.constant 0.000000e+00 : f32
      %22 = vector.broadcast %cst_17 : f32 to vector<8x128xf32>
      %c0_18 = arith.constant 0 : index
      %c0_19 = arith.constant 0 : index
      %23 = vector.load %arg7[%c0_18, %c0_19] : memref<8x128xf32, #tpu.memory_space<vmem>>, vector<8x128xf32>
      tpu.vector_store %arg7[%c0_18, %c0_19], %22 {strides = array<i32>} : memref<8x128xf32, #tpu.memory_space<vmem>>, vector<8x128xf32>,
    } else {
    }
    %c0 = arith.constant 0 : index
    %c0_1 = arith.constant 0 : index
    %c0_2 = arith.constant 0 : index
    %3 = vector.load %arg2[%c0, %c0_1, %c0_2] : memref<8x16x32xbf16, #tpu.memory_space<vmem>>, vector<8x16x32xbf16>
    %4 = vector.shape_cast %3 : vector<8x16x32xbf16> to vector<128x32xbf16>
    %c0_3 = arith.constant 0 : index
    %c0_4 = arith.constant 0 : index
    %5 = vector.load %arg5[%c0_3, %c0_4] : memref<32x128xbf16, #tpu.memory_space<vmem>>, vector<32x128xbf16>
    %cst = arith.constant dense<0.000000e+00> : vector<128x128xf32>
    %6 = tpu.matmul %4, %5, %cst {dimension_numbers = #tpu.dot_dimension_numbers<[1], [0], [0], [1], [0, 0, 1, 1], [], []>} : vector<128x32xbf16>, vector<32x128xbf16>, vector<128x128xf32> -> vector<128x128xf32>
    %c0_5 = arith.constant 0 : index
    %c0_6 = arith.constant 0 : index
    %7 = vector.load %arg6[%c0_5, %c0_6] : memref<1x128xf32, #tpu.memory_space<vmem>>, vector<1x128xf32>
    %8 = vector.broadcast %7 : vector<1x128xf32> to vector<128x128xf32>
    %9 = arith.addf %6, %8 : vector<128x128xf32>
    %10 = math.tanh %9 : vector<128x128xf32>
    %11 = vector.shape_cast %10 : vector<128x128xf32> to vector<8x16x128xf32>
    %c0_7 = arith.constant 0 : index
    %c0_8 = arith.constant 0 : index
    %12 = vector.load %arg7[%c0_7, %c0_8] : memref<8x128xf32, #tpu.memory_space<vmem>>, vector<8x128xf32>
    %c0_9 = arith.constant 0 : index
    %c0_10 = arith.constant 0 : index
    %c0_11 = arith.constant 0 : index
    %13 = vector.load %arg3[%c0_9, %c0_10, %c0_11] : memref<8x16x1xf32, #tpu.memory_space<vmem>>, vector<8x16x1xf32>
    %14 = vector.broadcast %13 : vector<8x16x1xf32> to vector<8x16x128xf32>
    %15 = arith.mulf %11, %14 : vector<8x16x128xf32>
    %cst_12 = arith.constant dense<0.000000e+00> : vector<8x128xf32>
    %16 = vector.multi_reduction <add>, %15, %cst_12 [1] : vector<8x16x128xf32> to vector<8x128xf32>
    %17 = arith.addf %12, %16 : vector<8x128xf32>
    %c0_13 = arith.constant 0 : index
    %c0_14 = arith.constant 0 : index
    %18 = vector.load %arg7[%c0_13, %c0_14] : memref<8x128xf32, #tpu.memory_space<vmem>>, vector<8x128xf32>
    tpu.vector_store %arg7[%c0_13, %c0_14], %17 {strides = array<i32>} : memref<8x128xf32, #tpu.memory_space<vmem>>, vector<8x128xf32>,
    %c0_i32_15 = arith.constant 0 : i32
    %19 = arith.cmpi eq, %arg1, %c0_i32_15 : i32
    %20 = arith.extui %19 : i1 to i32
    %c0_i32_16 = arith.constant 0 : i32
    %21 = arith.cmpi ne, %20, %c0_i32_16 : i32
    scf.if %21 {
      %c0_17 = arith.constant 0 : index
      %c0_18 = arith.constant 0 : index
      %22 = vector.load %arg7[%c0_17, %c0_18] : memref<8x128xf32, #tpu.memory_space<vmem>>, vector<8x128xf32>
      %c0_19 = arith.constant 0 : index
      %c0_20 = arith.constant 0 : index
      %23 = vector.load %arg4[%c0_19, %c0_20] : memref<8x1xf32, #tpu.memory_space<vmem>>, vector<8x1xf32>
      %24 = vector.broadcast %23 : vector<8x1xf32> to vector<8x128xf32>
      %25 = arith.mulf %22, %24 : vector<8x128xf32>
      %c0_21 = arith.constant 0 : index
      %c0_22 = arith.constant 0 : index
      %26 = vector.load %arg7[%c0_21, %c0_22] : memref<8x128xf32, #tpu.memory_space<vmem>>, vector<8x128xf32>
      tpu.vector_store %arg7[%c0_21, %c0_22], %25 {strides = array<i32>} : memref<8x128xf32, #tpu.memory_space<vmem>>, vector<8x128xf32>,
    } else {
    }
    return
  }
  func.func @transform_0(%arg0: i32, %arg1: i32) -> (i32, i32, i32) {
    %c0_i32 = arith.constant 0 : i32
    %c0_i32_0 = arith.constant 0 : i32
    return %arg0, %arg1, %c0_i32 : i32, i32, i32
  }
  func.func @transform_1(%arg0: i32, %arg1: i32) -> (i32, i32, i32) {
    %c0_i32 = arith.constant 0 : i32
    %c0_i32_0 = arith.constant 0 : i32
    return %arg0, %arg1, %c0_i32 : i32, i32, i32
  }
  func.func @transform_2(%arg0: i32, %arg1: i32) -> (i32, i32) {
    %c0_i32 = arith.constant 0 : i32
    %c0_i32_0 = arith.constant 0 : i32
    return %arg0, %c0_i32 : i32, i32
  }
  func.func @transform_3(%arg0: i32, %arg1: i32) -> (i32, i32) {
    %c0_i32 = arith.constant 0 : i32
    %c0_i32_0 = arith.constant 0 : i32
    %c0_i32_1 = arith.constant 0 : i32
    return %c0_i32, %c0_i32_0 : i32, i32
  }
  func.func @transform_4(%arg0: i32, %arg1: i32) -> (i32, i32) {
    %c0_i32 = arith.constant 0 : i32
    %c0_i32_0 = arith.constant 0 : i32
    %c0_i32_1 = arith.constant 0 : i32
    return %c0_i32, %c0_i32_0 : i32, i32
  }
  func.func @transform_5(%arg0: i32, %arg1: i32) -> (i32, i32) {
    %c0_i32 = arith.constant 0 : i32
    %c0_i32_0 = arith.constant 0 : i32
    return %arg0, %c0_i32 : i32, i32
  }
}

</mosaic_0001>

<llo_original>
// kernel: tpu_custom_call.1
$region0: #{tpu_custom_call.1}
  #allocation0 [shape = 'u32[]', space=smem, size = 0x4, offset = 0x4, fixed_abs, tag = 'smem constant byte address 0x4 - core index']
  #allocation1 [shape = 'u32[144,128]{1,0:T(1,128)}', space=vmem, size = 0x12000, scoped, tag = 'internal scratch']
  %s0 = inlined_call_operand.vmem [shape: bf16[8,16,32], index: 0, kind: input, shape index: {}]
  %s1 = inlined_call_operand.vmem [shape: f32[8,16,1], index: 1, kind: input, shape index: {}]
  %s2 = inlined_call_operand.vmem [shape: f32[8,1], index: 2, kind: input, shape index: {}]
  %s3 = inlined_call_operand.vmem [shape: bf16[32,128], index: 3, kind: input, shape index: {}]
  %s4 = inlined_call_operand.vmem [shape: f32[1,128], index: 4, kind: input, shape index: {}]
  %s5 = inlined_call_operand.hbm [shape: f32[8,128], index: 5, kind: output, shape index: {}]
  %s6 = sld [smem:[#allocation0]]
  $region38: #{tpu_custom_call.1} parent=0
    _
  %s8 = ssub.s32 1, %s6
  %s9 = scalar_select 0, %s8, %s6
  $region1: #{tpu_custom_call.1} parent=0
    #allocation2 [shape = 'u8[4096]{0}', space=vmem, size = 0x1000, scoped, tag = 'output window, operand 0, single buffered']
    #allocation3 [shape = 's32[1]{0}', space=sflag, size = 0x4, scoped, tag = 'scoped memory for tpu_custom_call.1']
    %10 = vsyncpa [#allocation3], 0
    // Predicated region
    $region2: #{tpu_custom_call.1} parent=1 // pred_check
      _
    $region3: #{tpu_custom_call.1} parent=1 // pred_check_branch
      %12 = sbr.rel (0) target = $region5
    $region4: #{tpu_custom_call.1} parent=1 // pred_region
      _
    $region5: #{tpu_custom_call.1} parent=1 // pred_fallthru
      _
    // Predicated region
    $region6: #{tpu_custom_call.1} parent=1 // pred_check
      _
    $region7: #{tpu_custom_call.1} parent=1 // pred_check_branch
      %14 = sbr.rel (0) target = $region9
    $region8: #{tpu_custom_call.1} parent=1 // pred_region
      _
    $region9: #{tpu_custom_call.1} parent=1 // pred_fallthru
      _
    // Predicated region
    $region10: #{tpu_custom_call.1} parent=1 // pred_check
      _
    $region11: #{tpu_custom_call.1} parent=1 // pred_check_branch
      %16 = sbr.rel (0) target = $region13
    $region12: #{tpu_custom_call.1} parent=1 // pred_region
      _
    $region13: #{tpu_custom_call.1} parent=1 // pred_fallthru
      _
    // Predicated region
    $region14: #{tpu_custom_call.1} parent=1 // pred_check
      _
    $region15: #{tpu_custom_call.1} parent=1 // pred_check_branch
      %18 = sbr.rel (0) target = $region17
    $region16: #{tpu_custom_call.1} parent=1 // pred_region
      _
    $region17: #{tpu_custom_call.1} parent=1 // pred_fallthru
      _
    // Predicated region
    $region18: #{tpu_custom_call.1} parent=1 // pred_check
      _
    $region19: #{tpu_custom_call.1} parent=1 // pred_check_branch
      %20 = sbr.rel (0) target = $region21
    $region20: #{tpu_custom_call.1} parent=1 // pred_region
      _
    $region21: #{tpu_custom_call.1} parent=1 // pred_fallthru
      _
    %p22 = scmp.eq.s32.totalorder 0, 0
    // Predicated region
    $region22: #{tpu_custom_call.1} parent=1 // pred_check
      %p23 = pneg %p22
    $region23: #{tpu_custom_call.1} parent=1 // pred_check_branch
      %25 = sbr.rel (%p23) target = $region25
    $region24: #{tpu_custom_call.1} parent=1 // pred_region
      %26 = vst [vmem:[#allocation2] sm:$0xff] 0.0
    $region25: #{tpu_custom_call.1} parent=1 // pred_fallthru
      _
    %v27 = vld [vmem:[%s0] sm:$0xf]
    %v28 = vld [vmem:[%s0 + $0x4] sm:$0xf]
    %v29 = vld [vmem:[%s0 + $0x8] sm:$0xf]
    %v30 = vld [vmem:[%s0 + $0xc] sm:$0xf]
    %v31 = vld [vmem:[%s0 + $0x10] sm:$0xf]
    %v32 = vld [vmem:[%s0 + $0x14] sm:$0xf]
    %v33 = vld [vmem:[%s0 + $0x18] sm:$0xf]
    %v34 = vld [vmem:[%s0 + $0x1c] sm:$0xf]
    %v35 = vld [vmem:[%s0 + $0x20] sm:$0xf]
    %v36 = vld [vmem:[%s0 + $0x24] sm:$0xf]
    %v37 = vld [vmem:[%s0 + $0x28] sm:$0xf]
    %v38 = vld [vmem:[%s0 + $0x2c] sm:$0xf]
    %v39 = vld [vmem:[%s0 + $0x30] sm:$0xf]
    %v40 = vld [vmem:[%s0 + $0x34] sm:$0xf]
    %v41 = vld [vmem:[%s0 + $0x38] sm:$0xf]
    %v42 = vld [vmem:[%s0 + $0x3c] sm:$0xf]
    %v43 = vld [vmem:[%s3] sm:$0xf]
    %v44 = vld [vmem:[%s3 + $0x4] sm:$0xf]
    %v45 = vld [vmem:[%s3 + $0x8] sm:$0xf]
    %v46 = vld [vmem:[%s3 + $0xc] sm:$0xf]
    %v47 = vld [vmem:[%s4] sm:$0x1]
    %v49 = vlaneseq
    %v50 = vshrl.u32 %v49, 7
    %v51 = vsub.s32 0, %v50
    %v52 = vrot.slane %v47, %v51
    %v70 = vunpack.c.l.b16 %v27
    %v71 = vunpack.c.l.b16 %v28
    %v72 = vunpack.c.l.b16 %v29
    %v73 = vunpack.c.l.b16 %v30
    %v74 = vunpack.c.l.b16 %v31
    %v75 = vunpack.c.l.b16 %v32
    %v76 = vunpack.c.l.b16 %v33
    %v77 = vunpack.c.l.b16 %v34
    %v78 = vunpack.c.l.b16 %v35
    %v79 = vunpack.c.l.b16 %v36
    %v80 = vunpack.c.l.b16 %v37
    %v81 = vunpack.c.l.b16 %v38
    %v82 = vunpack.c.l.b16 %v39
    %v83 = vunpack.c.l.b16 %v40
    %v84 = vunpack.c.l.b16 %v41
    %v85 = vunpack.c.l.b16 %v42
    %v86 = vpack.c.b16 %v71, %v70
    %v87 = vpack.c.b16 %v73, %v72
    %v88 = vpack.c.b16 %v75, %v74
    %v89 = vpack.c.b16 %v77, %v76
    %v90 = vpack.c.b16 %v79, %v78
    %v91 = vpack.c.b16 %v81, %v80
    %v92 = vpack.c.b16 %v83, %v82
    %v93 = vpack.c.b16 %v85, %v84
    %v98 = vunpack.c.l.b16 %v43
    %v99 = vunpack.c.l.b16 %v44
    %v100 = vunpack.c.l.b16 %v45
    %v101 = vunpack.c.l.b16 %v46
    %v102 = vpack.c.b16 %v99, %v98
    %v103 = vpack.c.b16 %v101, %v100
    %vm106 = vcmask 261120
    %v108 = vsel %vm106, %v86, 0
    %v111 = vsel %vm106, %v87, 0
    %v114 = vsel %vm106, %v88, 0
    %v117 = vsel %vm106, %v89, 0
    %v120 = vsel %vm106, %v90, 0
    %v123 = vsel %vm106, %v91, 0
    %v126 = vsel %vm106, %v92, 0
    %v129 = vsel %vm106, %v93, 0
    %131 = vmatprep.subr.bf16.mxu0 0
    %132 = vmatpush1.bf16.msra.mxu0 %v102
    %133 = vmatprep.subr.bf16.mxu0 0
    %134 = vmatpush1.bf16.msra.mxu0 %v103
    %135 = vmatprep.subr.bf16.mxu0 0
    %136 = vmatpush1.bf16.msra.mxu0 0
    %137 = vmatprep.subr.bf16.mxu0 0
    %138 = vmatpush1.bf16.msra.mxu0 0
    %139 = vmatprep.subr.bf16.mxu0 0
    %140 = vmatpush1.bf16.msra.mxu0 0
    %141 = vmatprep.subr.bf16.mxu0 0
    %142 = vmatpush1.bf16.msra.mxu0 0
    %143 = vmatprep.subr.bf16.mxu0 0
    %144 = vmatpush1.bf16.msra.mxu0 0
    %145 = vmatprep.subr.bf16.mxu0 0
    %146 = vmatpush1.bf16.msra.mxu0 0
    %147 = vmatprep.subr.bf16.mxu0 0
    %148 = vmatpush1.bf16.msra.mxu0 0
    %149 = vmatprep.subr.bf16.mxu0 0
    %150 = vmatpush1.bf16.msra.mxu0 0
    %151 = vmatprep.subr.bf16.mxu0 0
    %152 = vmatpush1.bf16.msra.mxu0 0
    %153 = vmatprep.subr.bf16.mxu0 0
    %154 = vmatpush1.bf16.msra.mxu0 0
    %155 = vmatprep.subr.bf16.mxu0 0
    %156 = vmatpush1.bf16.msra.mxu0 0
    %157 = vmatprep.subr.bf16.mxu0 0
    %158 = vmatpush1.bf16.msra.mxu0 0
    %159 = vmatprep.subr.bf16.mxu0 0
    %160 = vmatpush1.bf16.msra.mxu0 0
    %161 = vmatprep.subr.bf16.mxu0 0
    %162 = vmatpush1.bf16.msra.mxu0 0
    %163 = vmatprep.mubr.bf16.mxu0 0
    %164 = vmatmul.mubr.bf16.gmra.mrb[0].mxu0 %v108
    %v165 = vpop.f32.mrb[0].mxu0
    %v166 = vadd.f32 %v52, %v165
    %v167 = vpop.f32.mrb[0].mxu0
    %v168 = vpop.f32.mrb[0].mxu0
    %v169 = vadd.f32 %v52, %v168
    %v170 = vpop.f32.mrb[0].mxu0
    %171 = vmatprep.mubr.bf16.mxu0 0
    %172 = vmatmul.mubr.bf16.gmra.mrb[0].mxu0 %v111
    %v173 = vpop.f32.mrb[0].mxu0
    %v174 = vadd.f32 %v52, %v173
    %v175 = vpop.f32.mrb[0].mxu0
    %v176 = vpop.f32.mrb[0].mxu0
    %v177 = vadd.f32 %v52, %v176
    %v178 = vpop.f32.mrb[0].mxu0
    %179 = vmatprep.mubr.bf16.mxu0 0
    %180 = vmatmul.mubr.bf16.gmra.mrb[0].mxu0 %v114
    %v181 = vpop.f32.mrb[0].mxu0
    %v182 = vadd.f32 %v52, %v181
    %v183 = vpop.f32.mrb[0].mxu0
    %v184 = vpop.f32.mrb[0].mxu0
    %v185 = vadd.f32 %v52, %v184
    %v186 = vpop.f32.mrb[0].mxu0
    %187 = vmatprep.mubr.bf16.mxu0 0
    %188 = vmatmul.mubr.bf16.gmra.mrb[0].mxu0 %v117
    %v189 = vpop.f32.mrb[0].mxu0
    %v190 = vadd.f32 %v52, %v189
    %v191 = vpop.f32.mrb[0].mxu0
    %v192 = vpop.f32.mrb[0].mxu0
    %v193 = vadd.f32 %v52, %v192
    %v194 = vpop.f32.mrb[0].mxu0
    %195 = vmatprep.mubr.bf16.mxu0 0
    %196 = vmatmul.mubr.bf16.gmra.mrb[0].mxu0 %v120
    %v197 = vpop.f32.mrb[0].mxu0
    %v198 = vadd.f32 %v52, %v197
    %v199 = vpop.f32.mrb[0].mxu0
    %v200 = vpop.f32.mrb[0].mxu0
    %v201 = vadd.f32 %v52, %v200
    %v202 = vpop.f32.mrb[0].mxu0
    %203 = vmatprep.mubr.bf16.mxu0 0
    %204 = vmatmul.mubr.bf16.gmra.mrb[0].mxu0 %v123
    %v205 = vpop.f32.mrb[0].mxu0
    %v206 = vadd.f32 %v52, %v205
    %v207 = vpop.f32.mrb[0].mxu0
    %v208 = vpop.f32.mrb[0].mxu0
    %v209 = vadd.f32 %v52, %v208
    %v210 = vpop.f32.mrb[0].mxu0
    %211 = vmatprep.mubr.bf16.mxu0 0
    %212 = vmatmul.mubr.bf16.gmra.mrb[0].mxu0 %v126
    %v213 = vpop.f32.mrb[0].mxu0
    %v214 = vadd.f32 %v52, %v213
    %v215 = vpop.f32.mrb[0].mxu0
    %v216 = vpop.f32.mrb[0].mxu0
    %v217 = vadd.f32 %v52, %v216
    %v218 = vpop.f32.mrb[0].mxu0
    %219 = vmatprep.mubr.bf16.mxu0 0
    %220 = vmatmul.mubr.bf16.gmra.mrb[0].mxu0 %v129
    %v221 = vpop.f32.mrb[0].mxu0
    %v222 = vadd.f32 %v52, %v221
    %v223 = vpop.f32.mrb[0].mxu0
    %v224 = vpop.f32.mrb[0].mxu0
    %v225 = vadd.f32 %v52, %v224
    %v226 = vpop.f32.mrb[0].mxu0
    %227 = vdwg.mxu0
    %v228 = vtanh.pop %v166
    %v229 = vtanh.pop %v169
    %v230 = vtanh.pop %v174
    %v231 = vtanh.pop %v177
    %v232 = vtanh.pop %v182
    %v233 = vtanh.pop %v185
    %v234 = vtanh.pop %v190
    %v235 = vtanh.pop %v193
    %v236 = vtanh.pop %v198
    %v237 = vtanh.pop %v201
    %v238 = vtanh.pop %v206
    %v239 = vtanh.pop %v209
    %v240 = vtanh.pop %v214
    %v241 = vtanh.pop %v217
    %v242 = vtanh.pop %v222
    %v243 = vtanh.pop %v225
    %v244 = vld [vmem:[#allocation2] sm:$0xff]
    %v245 = vld [vmem:[%s1] sm:$0xff]
    %v246 = vld [vmem:[%s1 + $0x8] sm:$0xff]
    %v247 = vld [vmem:[%s1 + $0x10] sm:$0xff]
    %v248 = vld [vmem:[%s1 + $0x18] sm:$0xff]
    %v249 = vld [vmem:[%s1 + $0x20] sm:$0xff]
    %v250 = vld [vmem:[%s1 + $0x28] sm:$0xff]
    %v251 = vld [vmem:[%s1 + $0x30] sm:$0xff]
    %v252 = vld [vmem:[%s1 + $0x38] sm:$0xff]
    %v253 = vld [vmem:[%s1 + $0x40] sm:$0xff]
    %v254 = vld [vmem:[%s1 + $0x48] sm:$0xff]
    %v255 = vld [vmem:[%s1 + $0x50] sm:$0xff]
    %v256 = vld [vmem:[%s1 + $0x58] sm:$0xff]
    %v257 = vld [vmem:[%s1 + $0x60] sm:$0xff]
    %v258 = vld [vmem:[%s1 + $0x68] sm:$0xff]
    %v259 = vld [vmem:[%s1 + $0x70] sm:$0xff]
    %v260 = vld [vmem:[%s1 + $0x78] sm:$0xff]
    %262 = vset.pattern.permute.xlu0 0
    %263 = vperm.xlu0 %262, %v245
    %v264 = vpop.permute.xlu0 %263
    %267 = vset.pattern.permute.xlu0 0
    %268 = vperm.xlu0 %267, %v246
    %v269 = vpop.permute.xlu0 %268
    %272 = vset.pattern.permute.xlu0 0
    %273 = vperm.xlu0 %272, %v247
    %v274 = vpop.permute.xlu0 %273
    %277 = vset.pattern.permute.xlu0 0
    %278 = vperm.xlu0 %277, %v248
    %v279 = vpop.permute.xlu0 %278
    %282 = vset.pattern.permute.xlu0 0
    %283 = vperm.xlu0 %282, %v249
    %v284 = vpop.permute.xlu0 %283
    %287 = vset.pattern.permute.xlu0 0
    %288 = vperm.xlu0 %287, %v250
    %v289 = vpop.permute.xlu0 %288
    %292 = vset.pattern.permute.xlu0 0
    %293 = vperm.xlu0 %292, %v251
    %v294 = vpop.permute.xlu0 %293
    %297 = vset.pattern.permute.xlu0 0
    %298 = vperm.xlu0 %297, %v252
    %v299 = vpop.permute.xlu0 %298
    %302 = vset.pattern.permute.xlu0 0
    %303 = vperm.xlu0 %302, %v253
    %v304 = vpop.permute.xlu0 %303
    %307 = vset.pattern.permute.xlu0 0
    %308 = vperm.xlu0 %307, %v254
    %v309 = vpop.permute.xlu0 %308
    %312 = vset.pattern.permute.xlu0 0
    %313 = vperm.xlu0 %312, %v255
    %v314 = vpop.permute.xlu0 %313
    %317 = vset.pattern.permute.xlu0 0
    %318 = vperm.xlu0 %317, %v256
    %v319 = vpop.permute.xlu0 %318
    %322 = vset.pattern.permute.xlu0 0
    %323 = vperm.xlu0 %322, %v257
    %v324 = vpop.permute.xlu0 %323
    %327 = vset.pattern.permute.xlu0 0
    %328 = vperm.xlu0 %327, %v258
    %v329 = vpop.permute.xlu0 %328
    %332 = vset.pattern.permute.xlu0 0
    %333 = vperm.xlu0 %332, %v259
    %v334 = vpop.permute.xlu0 %333
    %337 = vset.pattern.permute.xlu0 0
    %338 = vperm.xlu0 %337, %v260
    %v339 = vpop.permute.xlu0 %338
    %v341 = vmul.f32 %v228, %v264
    %v342 = vmul.f32 %v229, %v269
    %v343 = vmul.f32 %v230, %v274
    %v344 = vmul.f32 %v231, %v279
    %v345 = vmul.f32 %v232, %v284
    %v346 = vmul.f32 %v233, %v289
    %v347 = vmul.f32 %v234, %v294
    %v348 = vmul.f32 %v235, %v299
    %v349 = vmul.f32 %v236, %v304
    %v350 = vmul.f32 %v237, %v309
    %v351 = vmul.f32 %v238, %v314
    %v352 = vmul.f32 %v239, %v319
    %v353 = vmul.f32 %v240, %v324
    %v354 = vmul.f32 %v241, %v329
    %v355 = vmul.f32 %v242, %v334
    %v356 = vmul.f32 %v243, %v339
    %v357 = vadd.f32 %v341, %v342
    %v358 = vrot.slane %v357, 4
    %v359 = vadd.f32 %v357, %v358
    %v360 = vrot.slane %v359, 2
    %v361 = vadd.f32 %v359, %v360
    %v362 = vrot.slane %v361, 1
    %v363 = vadd.f32 %v361, %v362
    %v364 = vadd.f32 %v343, %v344
    %v365 = vrot.slane %v364, 4
    %v366 = vadd.f32 %v364, %v365
    %v367 = vrot.slane %v366, 2
    %v368 = vadd.f32 %v366, %v367
    %v369 = vrot.slane %v368, 1
    %v370 = vadd.f32 %v368, %v369
    %v371 = vadd.f32 %v345, %v346
    %v372 = vrot.slane %v371, 4
    %v373 = vadd.f32 %v371, %v372
    %v374 = vrot.slane %v373, 2
    %v375 = vadd.f32 %v373, %v374
    %v376 = vrot.slane %v375, 1
    %v377 = vadd.f32 %v375, %v376
    %v378 = vadd.f32 %v347, %v348
    %v379 = vrot.slane %v378, 4
    %v380 = vadd.f32 %v378, %v379
    %v381 = vrot.slane %v380, 2
    %v382 = vadd.f32 %v380, %v381
    %v383 = vrot.slane %v382, 1
    %v384 = vadd.f32 %v382, %v383
    %v385 = vadd.f32 %v349, %v350
    %v386 = vrot.slane %v385, 4
    %v387 = vadd.f32 %v385, %v386
    %v388 = vrot.slane %v387, 2
    %v389 = vadd.f32 %v387, %v388
    %v390 = vrot.slane %v389, 1
    %v391 = vadd.f32 %v389, %v390
    %v392 = vadd.f32 %v351, %v352
    %v393 = vrot.slane %v392, 4
    %v394 = vadd.f32 %v392, %v393
    %v395 = vrot.slane %v394, 2
    %v396 = vadd.f32 %v394, %v395
    %v397 = vrot.slane %v396, 1
    %v398 = vadd.f32 %v396, %v397
    %v399 = vadd.f32 %v353, %v354
    %v400 = vrot.slane %v399, 4
    %v401 = vadd.f32 %v399, %v400
    %v402 = vrot.slane %v401, 2
    %v403 = vadd.f32 %v401, %v402
    %v404 = vrot.slane %v403, 1
    %v405 = vadd.f32 %v403, %v404
    %v406 = vadd.f32 %v355, %v356
    %v407 = vrot.slane %v406, 4
    %v408 = vadd.f32 %v406, %v407
    %v409 = vrot.slane %v408, 2
    %v410 = vadd.f32 %v408, %v409
    %v411 = vrot.slane %v410, 1
    %v412 = vadd.f32 %v410, %v411
    %vm421 = vcmask 1041409
    %v422 = vsel %vm421, %v370, %v363
    %vm423 = vcmask 1042434
    %v424 = vsel %vm423, %v377, %v422
    %vm425 = vcmask 1043459
    %v426 = vsel %vm425, %v384, %v424
    %vm427 = vcmask 1044484
    %v428 = vsel %vm427, %v391, %v426
    %vm429 = vcmask 1045509
    %v430 = vsel %vm429, %v398, %v428
    %vm431 = vcmask 1046534
    %v432 = vsel %vm431, %v405, %v430
    %vm433 = vcmask 1047559
    %v434 = vsel %vm433, %v412, %v432
    %v436 = vadd.f32 %v244, %v434
    %437 = vst [vmem:[#allocation2] sm:$0xff] %v436
    // Predicated region
    $region26: #{tpu_custom_call.1} parent=1 // pred_check
      %p438 = pneg %p22
    $region27: #{tpu_custom_call.1} parent=1 // pred_check_branch
      %440 = sbr.rel (%p438) target = $region29
    $region28: #{tpu_custom_call.1} parent=1 // pred_region
      %v441 = vld [vmem:[#allocation2] sm:$0xff]
      %v442 = vld [vmem:[%s2] sm:$0xff]
      %444 = vset.pattern.permute.xlu0 0
      %445 = vperm.xlu0 %444, %v442
      %v446 = vpop.permute.xlu0 %445
      %v448 = vmul.f32 %v441, %v446
      %449 = vst [vmem:[#allocation2] sm:$0xff] %v448
    $region29: #{tpu_custom_call.1} parent=1 // pred_fallthru
      _
    // Predicated region
    $region30: #{tpu_custom_call.1} parent=1 // pred_check
      _
    $region31: #{tpu_custom_call.1} parent=1 // pred_check_branch
      %451 = sbr.rel (0) target = $region33
    $region32: #{tpu_custom_call.1} parent=1 // pred_region
      %s453 = ssub.s32 128, 128
      %454 = vsyncadd [#allocation3], %s453
      %s456 = sshll.u32 [#allocation2], 4
      %s457 = int_to_ptr.vmem [resolvable:$true] %s456
      %459 = dma.vmem_to_hbm [thread:$0]  %s457, 128, %s5, [#allocation3]
    $region33: #{tpu_custom_call.1} parent=1 // pred_fallthru
      _
    // Predicated region
    $region34: #{tpu_custom_call.1} parent=1 // pred_check
      _
    $region35: #{tpu_custom_call.1} parent=1 // pred_check_branch
      %461 = sbr.rel (0) target = $region37
    $region36: #{tpu_custom_call.1} parent=1 // pred_region
      %462 = dma.done [#allocation3], 128
    $region37: #{tpu_custom_call.1} parent=1 // pred_fallthru
      _
    %463 = vsyncpa [#allocation3], 1

</llo_original>
